<compile_context>
chip_gen: v5e
topology: v5e:2x2
jax: 0.10.0
libtpu: 0.0.40
codegen_flags: <defaults>
</compile_context>

<pallas_src>
import functools
import math

import jax
import jax.numpy as jnp
from jax.experimental import pallas as pl
from jax.experimental.pallas import tpu as pltpu


# Conservative scoped-VMEM budget that fits every generation with headroom
# (v7x physical VMEM is 64 MiB; v5e/v6e have 128 MiB).
_VMEM_BUDGET_BYTES = 40 * 1024 * 1024


def _rmsnorm_kernel(x_ref, gamma_ref, o_ref, *, eps, hidden):
    # x_ref:     (TR, hidden) tile in VMEM (last block may be a clipped partial)
    # gamma_ref: (1, hidden)  resident in VMEM (constant block index)
    # o_ref:     (TR, hidden) output tile
    xf = x_ref[...].astype(jnp.float32)
    # Sum of squares over the lane axis; divide by the true hidden size.
    sumsq = jnp.sum(xf * xf, axis=-1, keepdims=True)             # (TR, 1)
    inv_rms = jax.lax.rsqrt(sumsq * (1.0 / hidden) + eps)        # EUP rsqrt
    gamma = gamma_ref[...].astype(jnp.float32)
    # Re-read x_ref so the full-tile f32 copy need not stay live across the
    # reduction (avoids a full-tile f32 spill; helps v5e's single vst slot).
    o_ref[...] = (gamma * (x_ref[...].astype(jnp.float32) * inv_rms)).astype(
        o_ref.dtype
    )


def _round_up(n, m):
    return ((n + m - 1) // m) * m


def rms_norm(x, gamma, eps=1e-5, *, row_tile_bytes=2 * 1024 * 1024):
    """RMSNorm along the last axis. x: (..., hidden), gamma: (hidden,)."""
    orig_shape = x.shape
    hidden = orig_shape[-1]
    rows = math.prod(orig_shape[:-1]) if len(orig_shape) > 1 else 1

    x2d = x.reshape(rows, hidden)
    gamma2d = gamma.reshape(1, hidden)

    itemsize = jnp.dtype(x.dtype).itemsize
    bytes_per_row = max(hidden * itemsize, 1)

    if rows <= 8:
        # First block dim equal to the full array dim (legal even if < 8).
        tr = rows
    else:
        # Target ~row_tile_bytes of *I/O* bytes per tile, multiple of 8 rows.
        tr = max(8, (row_tile_bytes // bytes_per_row) // 8 * 8)
        # Never larger than the (8-rounded) row count.
        tr = min(tr, _round_up(rows, 8))
        # Guarantee >= 2 grid steps so v7x can use both TensorCores.
        half_rows = max(8, _round_up((rows + 1) // 2, 8))
        tr = min(tr, half_rows)
        # VMEM cap: 2x in + 2x out tiles (I/O dtype) + ~2 f32 row-temps must
        # fit the scoped budget on every generation.
        per_row_vmem = 4 * bytes_per_row + 2 * hidden * 4
        tr = min(tr, max(8, (_VMEM_BUDGET_BYTES // per_row_vmem) // 8 * 8))
    # TODO(synk): for extremely wide hidden (a single 8-row tile exceeding the
    # VMEM budget) a hidden-axis grid dimension with a sumsq accumulator
    # (two-pass finalize via pl.when) would be required.

    grid = (pl.cdiv(rows, tr),)
    kernel = functools.partial(_rmsnorm_kernel, eps=eps, hidden=hidden)

    gamma_itemsize = jnp.dtype(gamma.dtype).itemsize
    cost = pl.CostEstimate(
        flops=4 * rows * hidden,
        transcendentals=rows,
        bytes_accessed=2 * rows * hidden * itemsize + hidden * gamma_itemsize,
    )

    out = pl.pallas_call(
        kernel,
        out_shape=jax.ShapeDtypeStruct((rows, hidden), x.dtype),
        grid_spec=pltpu.PrefetchScalarGridSpec(
            num_scalar_prefetch=0,
            grid=grid,
            in_specs=[
                pl.BlockSpec((tr, hidden), lambda i: (i, 0)),
                pl.BlockSpec((1, hidden), lambda i: (0, 0)),   # gamma resident
            ],
            out_specs=pl.BlockSpec((tr, hidden), lambda i: (i, 0)),
        ),
        compiler_params=pltpu.CompilerParams(
            dimension_semantics=("parallel",),   # rows independent; 2 TCs on v7x
            vmem_limit_bytes=_VMEM_BUDGET_BYTES,
        ),
        cost_estimate=cost,
    )(x2d, gamma2d)

    return out.reshape(orig_shape)


def rms_norm_ref(x, gamma, eps=1e-5):
    xf = x.astype(jnp.float32)
    rms = jnp.sqrt(jnp.mean(xf * xf, axis=-1, keepdims=True) + eps)
    return (gamma.astype(jnp.float32) * (xf / rms)).astype(x.dtype)


if __name__ == "__main__":
    key = jax.random.PRNGKey(0)

    # Case 1: PyTorch-spec shape (2, 3, 4), f32 (single full block).
    # Case 2: (2, 8, 32), f32 — hidden not a multiple of 128, 2 grid steps.
    # Case 3: (3, 5, 96), bf16 — rows % tr != 0 exercises partial-block clip.
    cases = [
        ((2, 3, 4), jnp.float32, 1e-5),
        ((2, 8, 32), jnp.float32, 1e-5),
        ((3, 5, 96), jnp.bfloat16, 2e-2),
    ]
    for shape, dtype, tol in cases:
        key, sub = jax.random.split(key)
        x = jax.random.normal(sub, shape, dtype=jnp.float32).astype(dtype)
        # Matches nn.Parameter(torch.ones(hidden_dim)); module default eps=1e-5.
        gamma = jnp.ones((shape[-1],), dtype=dtype)

        out = jax.block_until_ready(rms_norm(x, gamma, eps=1e-5))
        ref = rms_norm_ref(x, gamma, eps=1e-5)

        assert out.shape == x.shape, (out.shape, x.shape)
        assert jnp.allclose(
            out.astype(jnp.float32), ref.astype(jnp.float32), atol=tol, rtol=tol
        ), (shape, str(dtype))

    print("KERNEL_OK")
</pallas_src>

<mosaic_0001>
module attributes {stable_mosaic.version = 11 : i64} {
  func.func @_rmsnorm_kernel(%arg0: i32, %arg1: memref<6x4xf32, #tpu.memory_space<vmem>>, %arg2: memref<1x4xf32, #tpu.memory_space<vmem>>, %arg3: memref<6x4xf32, #tpu.memory_space<vmem>>) attributes {dimension_semantics = [#tpu.dimension_semantics<parallel>], iteration_bounds = array<i64: 1>, scalar_prefetch = 0 : i64, scratch_operands = 0 : i64, tpu.core_type = #tpu.core_type<tc>, window_params = [{transform_indices = @transform_0, window_bounds = array<i64: 6, 4>}, {pipeline_mode = #tpu.pipeline_mode<synchronous>, transform_indices = @transform_1, window_bounds = array<i64: 1, 4>}, {transform_indices = @transform_2, window_bounds = array<i64: 6, 4>}]} {
    %c0 = arith.constant 0 : index
    %c0_0 = arith.constant 0 : index
    %0 = vector.load %arg1[%c0, %c0_0] : memref<6x4xf32, #tpu.memory_space<vmem>>, vector<6x4xf32>
    %1 = arith.mulf %0, %0 : vector<6x4xf32>
    %cst = arith.constant dense<0.000000e+00> : vector<6xf32>
    %2 = vector.multi_reduction <add>, %1, %cst [1] : vector<6x4xf32> to vector<6xf32>
    %3 = vector.shape_cast %2 : vector<6xf32> to vector<6x1xf32>
    %cst_1 = arith.constant 2.500000e-01 : f32
    %4 = vector.broadcast %cst_1 : f32 to vector<6x1xf32>
    %5 = arith.mulf %3, %4 : vector<6x1xf32>
    %cst_2 = arith.constant 9.99999974E-6 : f32
    %6 = vector.broadcast %cst_2 : f32 to vector<6x1xf32>
    %7 = arith.addf %5, %6 : vector<6x1xf32>
    %8 = math.rsqrt %7 : vector<6x1xf32>
    %c0_3 = arith.constant 0 : index
    %c0_4 = arith.constant 0 : index
    %9 = vector.load %arg2[%c0_3, %c0_4] : memref<1x4xf32, #tpu.memory_space<vmem>>, vector<1x4xf32>
    %c0_5 = arith.constant 0 : index
    %c0_6 = arith.constant 0 : index
    %10 = vector.load %arg1[%c0_5, %c0_6] : memref<6x4xf32, #tpu.memory_space<vmem>>, vector<6x4xf32>
    %11 = vector.broadcast %8 : vector<6x1xf32> to vector<6x4xf32>
    %12 = arith.mulf %10, %11 : vector<6x4xf32>
    %13 = vector.broadcast %9 : vector<1x4xf32> to vector<6x4xf32>
    %14 = arith.mulf %13, %12 : vector<6x4xf32>
    %c0_7 = arith.constant 0 : index
    %c0_8 = arith.constant 0 : index
    %15 = vector.load %arg3[%c0_7, %c0_8] : memref<6x4xf32, #tpu.memory_space<vmem>>, vector<6x4xf32>
    tpu.vector_store %arg3[%c0_7, %c0_8], %14 {strides = array<i32>} : memref<6x4xf32, #tpu.memory_space<vmem>>, vector<6x4xf32>,
    return
  }
  func.func @transform_0(%arg0: i32) -> (i32, i32) {
    %c0_i32 = arith.constant 0 : i32
    %c0_i32_0 = arith.constant 0 : i32
    return %arg0, %c0_i32 : i32, i32
  }
  func.func @transform_1(%arg0: i32) -> (i32, i32) {
    %c0_i32 = arith.constant 0 : i32
    %c0_i32_0 = arith.constant 0 : i32
    %c0_i32_1 = arith.constant 0 : i32
    return %c0_i32, %c0_i32_0 : i32, i32
  }
  func.func @transform_2(%arg0: i32) -> (i32, i32) {
    %c0_i32 = arith.constant 0 : i32
    %c0_i32_0 = arith.constant 0 : i32
    return %arg0, %c0_i32 : i32, i32
  }
}

</mosaic_0001>

<llo_original>
// kernel: tpu_custom_call.1
$region0: #{tpu_custom_call.1}
  #allocation0 [shape = 'u32[]', space=smem, size = 0x4, offset = 0x4, fixed_abs, tag = 'smem constant byte address 0x4 - core index']
  #allocation1 [shape = 'u32[72,128]{1,0:T(1,128)}', space=vmem, size = 0x9000, scoped, tag = 'internal scratch']
  %s0 = inlined_call_operand.vmem [shape: f32[6,4], index: 0, kind: input, shape index: {}]
  %s1 = inlined_call_operand.vmem [shape: f32[1,4], index: 1, kind: input, shape index: {}]
  %s2 = inlined_call_operand.vmem [shape: f32[6,4], index: 2, kind: output, shape index: {}]
  %s3 = sld [smem:[#allocation0]]
  $region18: #{tpu_custom_call.1} parent=0
    _
  %s5 = ssub.s32 1, %s3
  %s6 = scalar_select 0, %s5, %s3
  // Predicated region
  $region2: #{tpu_custom_call.1} parent=0 // pred_check
    _
  $region3: #{tpu_custom_call.1} parent=0 // pred_check_branch
    %8 = sbr.rel (0) target = $region5
  $region4: #{tpu_custom_call.1} parent=0 // pred_region
    _
  $region5: #{tpu_custom_call.1} parent=0 // pred_fallthru
    _
  // Predicated region
  $region6: #{tpu_custom_call.1} parent=0 // pred_check
    _
  $region7: #{tpu_custom_call.1} parent=0 // pred_check_branch
    %10 = sbr.rel (0) target = $region9
  $region8: #{tpu_custom_call.1} parent=0 // pred_region
    _
  $region9: #{tpu_custom_call.1} parent=0 // pred_fallthru
    _
  %v11 = vld [vmem:[%s0] sm:$0x3f]
  %v12 = vmul.f32 %v11, %v11
  %vm13 = vcmask 29696
  %v14 = vsel %vm13, %v12, 0.0
  %15 = vadd.xlane.f32.xlu0 %v14
  %v16 = vpop.xlane.xlu0 %15
  %v17 = vmul.f32 %v16, 0.25
  %v18 = vadd.f32 %v17, 1e-05
  %v19 = vrsqrt.pop %v18
  %v20 = vmul.f32 %v19, %v18
  %v21 = vmul.f32 %v20, %v19
  %v22 = vmul.f32 0.5, %v21
  %v23 = vsub.f32 1.5, %v22
  %v24 = vmul.f32 %v19, %v23
  %vm25 = vweird.f32 %v18
  %vm26 = vweird.f32 %v19
  %vm27 = vmor %vm25, %vm26
  %v28 = vsel %vm27, %v19, %v24
  %v29 = vld [vmem:[%s1] sm:$0x1]
  %v30 = vmul.f32 %v11, %v28
  %v32 = vperm.slane %v29, 0
  %v34 = vmul.f32 %v32, %v30
  %35 = vst.msk [vmem:[%s2] sm:$0x3f] %vm13, %v34
  // Predicated region
  $region10: #{tpu_custom_call.1} parent=0 // pred_check
    _
  $region11: #{tpu_custom_call.1} parent=0 // pred_check_branch
    %37 = sbr.rel (0) target = $region13
  $region12: #{tpu_custom_call.1} parent=0 // pred_region
    _
  $region13: #{tpu_custom_call.1} parent=0 // pred_fallthru
    _
  // Predicated region
  $region14: #{tpu_custom_call.1} parent=0 // pred_check
    _
  $region15: #{tpu_custom_call.1} parent=0 // pred_check_branch
    %39 = sbr.rel (0) target = $region17
  $region16: #{tpu_custom_call.1} parent=0 // pred_region
    _
  $region17: #{tpu_custom_call.1} parent=0 // pred_fallthru
    _

</llo_original>
